<compile_context>
chip_gen: v5e
topology: v5e:2x2
jax: 0.10.0
libtpu: 0.0.40
codegen_flags: <defaults>
</compile_context>

<pallas_src>
import jax
import jax.numpy as jnp
from jax.experimental import pallas as pl
from jax.experimental.pallas import tpu as pltpu

_LANE = 128
_SUBLANE = 8


def _round_up(x, m):
    return ((x + m - 1) // m) * m


def _as_row(b):
    # Accept torch-style (out,) bias vectors as well as (1, out).
    return b.reshape(1, -1)


def _pad2(a, shape):
    pr = shape[0] - a.shape[0]
    pc = shape[1] - a.shape[1]
    if pr == 0 and pc == 0:
        return a
    return jnp.pad(a, ((0, pr), (0, pc)))


def _num_tensorcores():
    # v7x has 2 TensorCores per chip; v5e/v6e have 1.  Only split small
    # batches across multiple grid steps when there is >1 core to feed.
    try:
        kind = jax.devices()[0].device_kind.lower()
    except Exception:
        return 1
    if "v7" in kind or "7x" in kind:
        return 2
    return 1


def _mlp_kernel(x_ref, w1_ref, b1_ref, w2_ref, b2_ref, w3_ref, b3_ref, o_ref):
    # Whole hot path (3 matmuls + bias + ReLU) inside the kernel.  Matmuls run
    # in the weight dtype (f32 or bf16) with f32 accumulation; all elementwise
    # math (bias add, ReLU) stays in f32 (v5e has no bf16 VPU).
    wdt = w1_ref.dtype
    x = x_ref[...]

    h1 = jnp.dot(x, w1_ref[...], preferred_element_type=jnp.float32) + b1_ref[...]
    h1 = jnp.maximum(h1, 0.0)

    h2 = jnp.dot(h1.astype(wdt), w2_ref[...],
                 preferred_element_type=jnp.float32) + b2_ref[...]
    h2 = jnp.maximum(h2, 0.0)

    out = jnp.dot(h2.astype(wdt), w3_ref[...],
                  preferred_element_type=jnp.float32) + b3_ref[...]
    o_ref[...] = out.astype(o_ref.dtype)


def finger_regressor_forward(x, params, *, block_batch=8192, out_dtype=jnp.float32):
    """x: (B, num_features), float32 or bfloat16.  params: w1,b1,w2,b2,w3,b3.

    Weights are stored pre-transposed, W_l: (in_features, out_features), so the
    kernel computes y = x @ W + b (== torch's x @ weight.T + bias).
    The bf16 low-HBM-traffic path is used iff x already arrives as bf16.
    """
    B, F = x.shape
    NF = params["w3"].shape[1]

    in_dtype = x.dtype
    use_bf16 = in_dtype == jnp.bfloat16
    if not use_bf16 and in_dtype != jnp.float32:
        x = x.astype(jnp.float32)
        in_dtype = jnp.float32
    wdt = jnp.bfloat16 if use_bf16 else jnp.float32
    row_align = 16 if use_bf16 else _SUBLANE  # bf16 packs two rows per sublane

    # Hidden widths padded to full 128-lane vregs (zero padding — exact).
    # Output width is NOT padded: NF-wide masked stores are negligible here.
    h1_p = _round_up(16, _LANE)
    h2_p = _round_up(8, _LANE)

    w1 = _pad2(params["w1"], (F, h1_p)).astype(wdt)
    b1 = _pad2(_as_row(params["b1"]), (1, h1_p)).astype(jnp.float32)
    w2 = _pad2(params["w2"], (h1_p, h2_p)).astype(wdt)
    b2 = _pad2(_as_row(params["b2"]), (1, h2_p)).astype(jnp.float32)
    w3 = _pad2(params["w3"], (h2_p, NF)).astype(wdt)
    b3 = _as_row(params["b3"]).astype(jnp.float32)

    # --- batch tiling ---------------------------------------------------------
    # Tiny batches (< one aligned row group): pad rows once (negligible copy).
    x_in = x
    B_eff = B
    if B < row_align:
        B_eff = row_align
        x_in = jnp.pad(x, ((0, B_eff - B), (0, 0)))

    # Large tiles to amortize the ~0.35us/step overhead; never larger than the
    # row-aligned batch, so blocks never exceed the array along rows.  Ragged
    # tails (B_eff % tb != 0) are handled by Pallas boundary-block masking.
    tb = max(row_align, min(_round_up(block_batch, row_align),
                            (B_eff // row_align) * row_align))

    n_tc = _num_tensorcores()
    if n_tc > 1 and B_eff >= n_tc * row_align:
        # Keep the grid length a multiple of the TC count so both cores get
        # (nearly) equal work; no-op on single-TC v5e/v6e.
        g = _round_up(pl.cdiv(B_eff, tb), n_tc)
        tb = max(row_align, min(tb, _round_up(pl.cdiv(B_eff, g), row_align)))

    grid = (pl.cdiv(B_eff, tb),)

    # --- VMEM budget / cost estimate -----------------------------------------
    in_itemsize = jnp.dtype(in_dtype).itemsize
    out_itemsize = jnp.dtype(out_dtype).itemsize
    weight_args = (w1, b1, w2, b2, w3, b3)
    weights_bytes = sum(int(a.size) * a.dtype.itemsize for a in weight_args)
    vmem_need = (2 * tb * F * in_itemsize          # double-buffered x tile
                 + 2 * tb * NF * out_itemsize      # double-buffered out tile
                 + 2 * weights_bytes               # double-buffered weights/biases
                 + 2 * tb * _LANE * 4              # h1/h2 f32 intermediates
                 + (1 << 20))                      # headroom
    vmem_limit = int(min(max(2 * vmem_need, 16 << 20), 64 << 20))

    flops = 2 * B_eff * (F * h1_p + h1_p * h2_p + h2_p * NF)
    bytes_accessed = (B_eff * F * in_itemsize
                      + weights_bytes
                      + B_eff * NF * out_itemsize)
    cost = pl.CostEstimate(flops=int(flops), transcendentals=0,
                           bytes_accessed=int(bytes_accessed))

    def full_spec(a):
        nd = a.ndim
        return pl.BlockSpec(a.shape, lambda i, _nd=nd: (0,) * _nd)

    out = pl.pallas_call(
        _mlp_kernel,
        out_shape=jax.ShapeDtypeStruct((B_eff, NF), out_dtype),
        grid_spec=pltpu.PrefetchScalarGridSpec(
            num_scalar_prefetch=0,
            grid=grid,
            in_specs=[
                pl.BlockSpec((tb, F), lambda i: (i, 0)),   # x tile over batch
                full_spec(w1), full_spec(b1),
                full_spec(w2), full_spec(b2),
                full_spec(w3), full_spec(b3),
            ],
            out_specs=pl.BlockSpec((tb, NF), lambda i: (i, 0)),
        ),
        compiler_params=pltpu.CompilerParams(
            dimension_semantics=("parallel",),
            vmem_limit_bytes=vmem_limit,
        ),
        cost_estimate=cost,
    )(x_in, w1, b1, w2, b2, w3, b3)

    if B_eff != B:
        out = out[:B]
    return out


def init_params(key, num_features, num_fingers):
    """Xavier-normal weights (nn.init.xavier_normal_) and torch-default
    uniform biases; weights stored pre-transposed (in, out), biases 1-D."""
    ks = jax.random.split(key, 6)

    def xavier_normal(k, fan_in, fan_out):
        std = jnp.sqrt(2.0 / (fan_in + fan_out))
        return (std * jax.random.normal(k, (fan_in, fan_out))).astype(jnp.float32)

    def bias(k, fan_in, fan_out):
        bound = 1.0 / jnp.sqrt(fan_in)
        return jax.random.uniform(k, (fan_out,), minval=-bound, maxval=bound,
                                  dtype=jnp.float32)

    return {
        "w1": xavier_normal(ks[0], num_features, 16),
        "b1": bias(ks[1], num_features, 16),
        "w2": xavier_normal(ks[2], 16, 8),
        "b2": bias(ks[3], 16, 8),
        "w3": xavier_normal(ks[4], 8, num_fingers),
        "b3": bias(ks[5], 8, num_fingers),
    }


def _reference_forward(x, p):
    h1 = jnp.maximum(x @ p["w1"] + p["b1"], 0.0)
    h2 = jnp.maximum(h1 @ p["w2"] + p["b2"], 0.0)
    return h2 @ p["w3"] + p["b3"]


if __name__ == "__main__":
    num_features = 32
    num_fingers = 5
    batch = 16

    key = jax.random.PRNGKey(0)
    k_x, k_p = jax.random.split(key)

    x = jax.random.normal(k_x, (batch, num_features), dtype=jnp.float32)
    params = init_params(k_p, num_features, num_fingers)

    # f32 path: matches the reference.
    out = jax.block_until_ready(finger_regressor_forward(x, params))
    ref = _reference_forward(x, params)
    assert out.shape == (batch, num_fingers)
    assert jnp.allclose(out, ref, atol=1e-5, rtol=1e-5), "mismatch vs reference"

    # Ragged batch (not a multiple of the tile): exercises the in-kernel
    # boundary-block handling — no wrapper-side padding of x.
    x_odd = jax.random.normal(k_x, (batch + 3, num_features), dtype=jnp.float32)
    out_odd = jax.block_until_ready(finger_regressor_forward(x_odd, params))
    assert out_odd.shape == (batch + 3, num_fingers)
    assert jnp.allclose(out_odd, _reference_forward(x_odd, params),
                        atol=1e-5, rtol=1e-5), "ragged-batch mismatch"

    # bf16 path: taken only because x arrives as bf16 from "upstream";
    # error comes from input/activation quantization, accumulation is f32.
    x_bf16 = x.astype(jnp.bfloat16)
    out_bf16 = jax.block_until_ready(finger_regressor_forward(x_bf16, params))
    assert out_bf16.shape == (batch, num_fingers)
    assert jnp.allclose(out_bf16.astype(jnp.float32), ref,
                        atol=5e-2, rtol=5e-2), "bf16 path mismatch"

    print("KERNEL_OK")
</pallas_src>

<mosaic_0001>
module attributes {stable_mosaic.version = 11 : i64} {
  func.func @_mlp_kernel(%arg0: i32, %arg1: memref<16x32xf32, #tpu.memory_space<vmem>>, %arg2: memref<32x128xf32, #tpu.memory_space<vmem>>, %arg3: memref<1x128xf32, #tpu.memory_space<vmem>>, %arg4: memref<128x128xf32, #tpu.memory_space<vmem>>, %arg5: memref<1x128xf32, #tpu.memory_space<vmem>>, %arg6: memref<128x5xf32, #tpu.memory_space<vmem>>, %arg7: memref<1x5xf32, #tpu.memory_space<vmem>>, %arg8: memref<16x5xf32, #tpu.memory_space<vmem>>) attributes {dimension_semantics = [#tpu.dimension_semantics<parallel>], iteration_bounds = array<i64: 1>, scalar_prefetch = 0 : i64, scratch_operands = 0 : i64, tpu.core_type = #tpu.core_type<tc>, window_params = [{transform_indices = @transform_0, window_bounds = array<i64: 16, 32>}, {pipeline_mode = #tpu.pipeline_mode<synchronous>, transform_indices = @transform_1, window_bounds = array<i64: 32, 128>}, {pipeline_mode = #tpu.pipeline_mode<synchronous>, transform_indices = @transform_2, window_bounds = array<i64: 1, 128>}, {pipeline_mode = #tpu.pipeline_mode<synchronous>, transform_indices = @transform_3, window_bounds = array<i64: 128, 128>}, {pipeline_mode = #tpu.pipeline_mode<synchronous>, transform_indices = @transform_4, window_bounds = array<i64: 1, 128>}, {pipeline_mode = #tpu.pipeline_mode<synchronous>, transform_indices = @transform_5, window_bounds = array<i64: 128, 5>}, {pipeline_mode = #tpu.pipeline_mode<synchronous>, transform_indices = @transform_6, window_bounds = array<i64: 1, 5>}, {transform_indices = @transform_7, window_bounds = array<i64: 16, 5>}]} {
    %c0 = arith.constant 0 : index
    %c0_0 = arith.constant 0 : index
    %0 = vector.load %arg1[%c0, %c0_0] : memref<16x32xf32, #tpu.memory_space<vmem>>, vector<16x32xf32>
    %c0_1 = arith.constant 0 : index
    %c0_2 = arith.constant 0 : index
    %1 = vector.load %arg2[%c0_1, %c0_2] : memref<32x128xf32, #tpu.memory_space<vmem>>, vector<32x128xf32>
    %cst = arith.constant dense<0.000000e+00> : vector<16x128xf32>
    %2 = tpu.matmul %0, %1, %cst {dimension_numbers = #tpu.dot_dimension_numbers<[1], [0], [0], [1], [0, 0, 1, 1], [], []>} : vector<16x32xf32>, vector<32x128xf32>, vector<16x128xf32> -> vector<16x128xf32>
    %c0_3 = arith.constant 0 : index
    %c0_4 = arith.constant 0 : index
    %3 = vector.load %arg3[%c0_3, %c0_4] : memref<1x128xf32, #tpu.memory_space<vmem>>, vector<1x128xf32>
    %4 = vector.broadcast %3 : vector<1x128xf32> to vector<16x128xf32>
    %5 = arith.addf %2, %4 : vector<16x128xf32>
    %cst_5 = arith.constant 0.000000e+00 : f32
    %6 = vector.broadcast %cst_5 : f32 to vector<16x128xf32>
    %7 = arith.maximumf %5, %6 : vector<16x128xf32>
    %c0_6 = arith.constant 0 : index
    %c0_7 = arith.constant 0 : index
    %8 = vector.load %arg4[%c0_6, %c0_7] : memref<128x128xf32, #tpu.memory_space<vmem>>, vector<128x128xf32>
    %cst_8 = arith.constant dense<0.000000e+00> : vector<16x128xf32>
    %9 = tpu.matmul %7, %8, %cst_8 {dimension_numbers = #tpu.dot_dimension_numbers<[1], [0], [0], [1], [0, 0, 1, 1], [], []>} : vector<16x128xf32>, vector<128x128xf32>, vector<16x128xf32> -> vector<16x128xf32>
    %c0_9 = arith.constant 0 : index
    %c0_10 = arith.constant 0 : index
    %10 = vector.load %arg5[%c0_9, %c0_10] : memref<1x128xf32, #tpu.memory_space<vmem>>, vector<1x128xf32>
    %11 = vector.broadcast %10 : vector<1x128xf32> to vector<16x128xf32>
    %12 = arith.addf %9, %11 : vector<16x128xf32>
    %cst_11 = arith.constant 0.000000e+00 : f32
    %13 = vector.broadcast %cst_11 : f32 to vector<16x128xf32>
    %14 = arith.maximumf %12, %13 : vector<16x128xf32>
    %c0_12 = arith.constant 0 : index
    %c0_13 = arith.constant 0 : index
    %15 = vector.load %arg6[%c0_12, %c0_13] : memref<128x5xf32, #tpu.memory_space<vmem>>, vector<128x5xf32>
    %cst_14 = arith.constant dense<0.000000e+00> : vector<16x5xf32>
    %16 = tpu.matmul %14, %15, %cst_14 {dimension_numbers = #tpu.dot_dimension_numbers<[1], [0], [0], [1], [0, 0, 1, 1], [], []>} : vector<16x128xf32>, vector<128x5xf32>, vector<16x5xf32> -> vector<16x5xf32>
    %c0_15 = arith.constant 0 : index
    %c0_16 = arith.constant 0 : index
    %17 = vector.load %arg7[%c0_15, %c0_16] : memref<1x5xf32, #tpu.memory_space<vmem>>, vector<1x5xf32>
    %18 = vector.broadcast %17 : vector<1x5xf32> to vector<16x5xf32>
    %19 = arith.addf %16, %18 : vector<16x5xf32>
    %c0_17 = arith.constant 0 : index
    %c0_18 = arith.constant 0 : index
    %20 = vector.load %arg8[%c0_17, %c0_18] : memref<16x5xf32, #tpu.memory_space<vmem>>, vector<16x5xf32>
    tpu.vector_store %arg8[%c0_17, %c0_18], %19 {strides = array<i32>} : memref<16x5xf32, #tpu.memory_space<vmem>>, vector<16x5xf32>,
    return
  }
  func.func @transform_0(%arg0: i32) -> (i32, i32) {
    %c0_i32 = arith.constant 0 : i32
    %c0_i32_0 = arith.constant 0 : i32
    return %arg0, %c0_i32 : i32, i32
  }
  func.func @transform_1(%arg0: i32) -> (i32, i32) {
    %c0_i32 = arith.constant 0 : i32
    %c0_i32_0 = arith.constant 0 : i32
    %c0_i32_1 = arith.constant 0 : i32
    return %c0_i32, %c0_i32_0 : i32, i32
  }
  func.func @transform_2(%arg0: i32) -> (i32, i32) {
    %c0_i32 = arith.constant 0 : i32
    %c0_i32_0 = arith.constant 0 : i32
    %c0_i32_1 = arith.constant 0 : i32
    return %c0_i32, %c0_i32_0 : i32, i32
  }
  func.func @transform_3(%arg0: i32) -> (i32, i32) {
    %c0_i32 = arith.constant 0 : i32
    %c0_i32_0 = arith.constant 0 : i32
    %c0_i32_1 = arith.constant 0 : i32
    return %c0_i32, %c0_i32_0 : i32, i32
  }
  func.func @transform_4(%arg0: i32) -> (i32, i32) {
    %c0_i32 = arith.constant 0 : i32
    %c0_i32_0 = arith.constant 0 : i32
    %c0_i32_1 = arith.constant 0 : i32
    return %c0_i32, %c0_i32_0 : i32, i32
  }
  func.func @transform_5(%arg0: i32) -> (i32, i32) {
    %c0_i32 = arith.constant 0 : i32
    %c0_i32_0 = arith.constant 0 : i32
    %c0_i32_1 = arith.constant 0 : i32
    return %c0_i32, %c0_i32_0 : i32, i32
  }
  func.func @transform_6(%arg0: i32) -> (i32, i32) {
    %c0_i32 = arith.constant 0 : i32
    %c0_i32_0 = arith.constant 0 : i32
    %c0_i32_1 = arith.constant 0 : i32
    return %c0_i32, %c0_i32_0 : i32, i32
  }
  func.func @transform_7(%arg0: i32) -> (i32, i32) {
    %c0_i32 = arith.constant 0 : i32
    %c0_i32_0 = arith.constant 0 : i32
    return %arg0, %c0_i32 : i32, i32
  }
}

</mosaic_0001>

<llo_original>
// kernel: tpu_custom_call.1
$region0: #{tpu_custom_call.1}
  #allocation0 [shape = 'u32[]', space=smem, size = 0x4, offset = 0x4, fixed_abs, tag = 'smem constant byte address 0x4 - core index']
  #allocation1 [shape = 'u32[72,128]{1,0:T(1,128)}', space=vmem, size = 0x9000, scoped, tag = 'internal scratch']
  %s0 = inlined_call_operand.hbm [shape: f32[16,32], index: 0, kind: input, shape index: {}]
  %s1 = inlined_call_operand.hbm [shape: f32[32,128], index: 1, kind: input, shape index: {}]
  %s2 = inlined_call_operand.vmem [shape: f32[1,128], index: 2, kind: input, shape index: {}]
  %s3 = inlined_call_operand.vmem [shape: f32[128,128], index: 3, kind: input, shape index: {}]
  %s4 = inlined_call_operand.vmem [shape: f32[1,128], index: 4, kind: input, shape index: {}]
  %s5 = inlined_call_operand.vmem [shape: f32[128,5], index: 5, kind: input, shape index: {}]
  %s6 = inlined_call_operand.vmem [shape: f32[1,5], index: 6, kind: input, shape index: {}]
  %s7 = inlined_call_operand.vmem [shape: f32[16,5], index: 7, kind: output, shape index: {}]
  %s8 = sld [smem:[#allocation0]]
  $region46: #{tpu_custom_call.1} parent=0
    _
  %s10 = ssub.s32 1, %s8
  %s11 = scalar_select 0, %s10, %s8
  $region1: #{tpu_custom_call.1} parent=0
    #allocation2 [shape = 'u8[8192]{0}', space=vmem, size = 0x2000, scoped, tag = 'input window, operand 0, single buffered']
    #allocation3 [shape = 's32[1]{0}', space=sflag, size = 0x4, scoped, tag = 'scoped memory for tpu_custom_call.1']
    #allocation4 [shape = 'u8[16384]{0}', space=vmem, size = 0x4000, scoped, tag = 'input window, operand 1, single buffered']
    #allocation5 [shape = 's32[1]{0}', space=sflag, size = 0x4, scoped, tag = 'scoped memory for tpu_custom_call.1']
    %12 = vsyncpa [#allocation3], 0
    %13 = vsyncpa [#allocation5], 0
    // Predicated region
    $region2: #{tpu_custom_call.1} parent=1 // pred_check
      _
    $region3: #{tpu_custom_call.1} parent=1 // pred_check_branch
      %15 = sbr.rel (0) target = $region5
    $region4: #{tpu_custom_call.1} parent=1 // pred_region
      %17 = vsyncadd [#allocation3], 0
      %s18 = sshll.u32 %s0, 4
      %s19 = int_to_ptr.hbm [resolvable:$true] %s18
      %s20 = sshll.u32 [#allocation2], 4
      %s21 = int_to_ptr.vmem [resolvable:$true] %s20
      %26 = dma.hbm_to_vmem [thread:$0]  %s19, 256, %s21, [#allocation3], 128, 128, 8
    $region5: #{tpu_custom_call.1} parent=1 // pred_fallthru
      _
    // Predicated region
    $region6: #{tpu_custom_call.1} parent=1 // pred_check
      _
    $region7: #{tpu_custom_call.1} parent=1 // pred_check_branch
      %28 = sbr.rel (0) target = $region9
    $region8: #{tpu_custom_call.1} parent=1 // pred_region
      %30 = vsyncadd [#allocation5], 0
      %s31 = sshll.u32 %s1, 4
      %s32 = int_to_ptr.hbm [resolvable:$true] %s31
      %s33 = sshll.u32 [#allocation4], 4
      %s34 = int_to_ptr.vmem [resolvable:$true] %s33
      %39 = dma.hbm_to_vmem [thread:$0]  %s32, 512, %s34, [#allocation5], 128, 128, 8
    $region9: #{tpu_custom_call.1} parent=1 // pred_fallthru
      _
    // Predicated region
    $region10: #{tpu_custom_call.1} parent=1 // pred_check
      _
    $region11: #{tpu_custom_call.1} parent=1 // pred_check_branch
      %41 = sbr.rel (0) target = $region13
    $region12: #{tpu_custom_call.1} parent=1 // pred_region
      _
    $region13: #{tpu_custom_call.1} parent=1 // pred_fallthru
      _
    // Predicated region
    $region14: #{tpu_custom_call.1} parent=1 // pred_check
      _
    $region15: #{tpu_custom_call.1} parent=1 // pred_check_branch
      %43 = sbr.rel (0) target = $region17
    $region16: #{tpu_custom_call.1} parent=1 // pred_region
      _
    $region17: #{tpu_custom_call.1} parent=1 // pred_fallthru
      _
    // Predicated region
    $region18: #{tpu_custom_call.1} parent=1 // pred_check
      _
    $region19: #{tpu_custom_call.1} parent=1 // pred_check_branch
      %45 = sbr.rel (0) target = $region21
    $region20: #{tpu_custom_call.1} parent=1 // pred_region
      _
    $region21: #{tpu_custom_call.1} parent=1 // pred_fallthru
      _
    // Predicated region
    $region22: #{tpu_custom_call.1} parent=1 // pred_check
      _
    $region23: #{tpu_custom_call.1} parent=1 // pred_check_branch
      %47 = sbr.rel (0) target = $region25
    $region24: #{tpu_custom_call.1} parent=1 // pred_region
      _
    $region25: #{tpu_custom_call.1} parent=1 // pred_fallthru
      _
    // Predicated region
    $region26: #{tpu_custom_call.1} parent=1 // pred_check
      _
    $region27: #{tpu_custom_call.1} parent=1 // pred_check_branch
      %49 = sbr.rel (0) target = $region29
    $region28: #{tpu_custom_call.1} parent=1 // pred_region
      _
    $region29: #{tpu_custom_call.1} parent=1 // pred_fallthru
      _
    // Predicated region
    $region30: #{tpu_custom_call.1} parent=1 // pred_check
      _
    $region31: #{tpu_custom_call.1} parent=1 // pred_check_branch
      %51 = sbr.rel (0) target = $region33
    $region32: #{tpu_custom_call.1} parent=1 // pred_region
      %53 = dma.done [#allocation3], 256
    $region33: #{tpu_custom_call.1} parent=1 // pred_fallthru
      _
    // Predicated region
    $region34: #{tpu_custom_call.1} parent=1 // pred_check
      _
    $region35: #{tpu_custom_call.1} parent=1 // pred_check_branch
      %55 = sbr.rel (0) target = $region37
    $region36: #{tpu_custom_call.1} parent=1 // pred_region
      %57 = dma.done [#allocation5], 512
    $region37: #{tpu_custom_call.1} parent=1 // pred_fallthru
      _
    %v58 = vld [vmem:[#allocation2] sm:$0xff]
    %v59 = vld [vmem:[#allocation2 + $0x8] sm:$0xff]
    %v60 = vld [vmem:[#allocation4] sm:$0xff]
    %v61 = vld [vmem:[#allocation4 + $0x8] sm:$0xff]
    %v62 = vld [vmem:[#allocation4 + $0x10] sm:$0xff]
    %v63 = vld [vmem:[#allocation4 + $0x18] sm:$0xff]
    %v64 = vld [vmem:[%s2] sm:$0x1]
    %v66 = vperm.slane %v64, 0
    %vm68 = vcmask 261120
    %v70 = vsel %vm68, %v58, 0
    %v73 = vsel %vm68, %v59, 0
    %75 = vmatpush.msra.mxu0 0.0
    %76 = vmatpush.msra.mxu0 0.0
    %77 = vmatpush.msra.mxu0 0.0
    %78 = vmatpush.msra.mxu0 0.0
    %79 = vmatpush.msra.mxu0 0.0
    %80 = vmatpush.msra.mxu0 0.0
    %81 = vmatpush.msra.mxu0 0.0
    %82 = vmatpush.msra.mxu0 0.0
    %83 = vmatpush.msra.mxu0 0.0
    %84 = vmatpush.msra.mxu0 0.0
    %85 = vmatpush.msra.mxu0 0.0
    %86 = vmatpush.msra.mxu0 0.0
    %87 = vmatpush.msra.mxu0 %v63
    %88 = vmatpush.msra.mxu0 %v62
    %89 = vmatpush.msra.mxu0 %v61
    %90 = vmatpush.msra.mxu0 %v60
    %91 = vmatmul.f32.gmra.mxu0 %v70
    %v92 = vpop.f32.mrf.mxu0
    %v93 = vadd.f32 %v66, %v92
    %94 = vmatmul.f32.gmra.mxu0 %v73
    %v95 = vpop.f32.mrf.mxu0
    %v96 = vadd.f32 %v66, %v95
    %97 = vdwg.mxu0
    %v98 = vmax.f32 %v93, 0.0
    %v99 = vmax.f32 %v96, 0.0
    %v100 = vld [vmem:[%s3] sm:$0xff]
    %v101 = vld [vmem:[%s3 + $0x8] sm:$0xff]
    %v102 = vld [vmem:[%s3 + $0x10] sm:$0xff]
    %v103 = vld [vmem:[%s3 + $0x18] sm:$0xff]
    %v104 = vld [vmem:[%s3 + $0x20] sm:$0xff]
    %v105 = vld [vmem:[%s3 + $0x28] sm:$0xff]
    %v106 = vld [vmem:[%s3 + $0x30] sm:$0xff]
    %v107 = vld [vmem:[%s3 + $0x38] sm:$0xff]
    %v108 = vld [vmem:[%s3 + $0x40] sm:$0xff]
    %v109 = vld [vmem:[%s3 + $0x48] sm:$0xff]
    %v110 = vld [vmem:[%s3 + $0x50] sm:$0xff]
    %v111 = vld [vmem:[%s3 + $0x58] sm:$0xff]
    %v112 = vld [vmem:[%s3 + $0x60] sm:$0xff]
    %v113 = vld [vmem:[%s3 + $0x68] sm:$0xff]
    %v114 = vld [vmem:[%s3 + $0x70] sm:$0xff]
    %v115 = vld [vmem:[%s3 + $0x78] sm:$0xff]
    %v116 = vld [vmem:[%s4] sm:$0x1]
    %v118 = vperm.slane %v116, 0
    %120 = vmatpush.msra.mxu0 %v115
    %121 = vmatpush.msra.mxu0 %v114
    %122 = vmatpush.msra.mxu0 %v113
    %123 = vmatpush.msra.mxu0 %v112
    %124 = vmatpush.msra.mxu0 %v111
    %125 = vmatpush.msra.mxu0 %v110
    %126 = vmatpush.msra.mxu0 %v109
    %127 = vmatpush.msra.mxu0 %v108
    %128 = vmatpush.msra.mxu0 %v107
    %129 = vmatpush.msra.mxu0 %v106
    %130 = vmatpush.msra.mxu0 %v105
    %131 = vmatpush.msra.mxu0 %v104
    %132 = vmatpush.msra.mxu0 %v103
    %133 = vmatpush.msra.mxu0 %v102
    %134 = vmatpush.msra.mxu0 %v101
    %135 = vmatpush.msra.mxu0 %v100
    %136 = vmatmul.f32.gmra.mxu0 %v98
    %v137 = vpop.f32.mrf.mxu0
    %v138 = vadd.f32 %v118, %v137
    %139 = vmatmul.f32.gmra.mxu0 %v99
    %v140 = vpop.f32.mrf.mxu0
    %v141 = vadd.f32 %v118, %v140
    %142 = vdwg.mxu0
    %v143 = vmax.f32 %v138, 0.0
    %v144 = vmax.f32 %v141, 0.0
    %v145 = vld [vmem:[%s5] sm:$0xff]
    %v146 = vld [vmem:[%s5 + $0x8] sm:$0xff]
    %v147 = vld [vmem:[%s5 + $0x10] sm:$0xff]
    %v148 = vld [vmem:[%s5 + $0x18] sm:$0xff]
    %v149 = vld [vmem:[%s5 + $0x20] sm:$0xff]
    %v150 = vld [vmem:[%s5 + $0x28] sm:$0xff]
    %v151 = vld [vmem:[%s5 + $0x30] sm:$0xff]
    %v152 = vld [vmem:[%s5 + $0x38] sm:$0xff]
    %v153 = vld [vmem:[%s5 + $0x40] sm:$0xff]
    %v154 = vld [vmem:[%s5 + $0x48] sm:$0xff]
    %v155 = vld [vmem:[%s5 + $0x50] sm:$0xff]
    %v156 = vld [vmem:[%s5 + $0x58] sm:$0xff]
    %v157 = vld [vmem:[%s5 + $0x60] sm:$0xff]
    %v158 = vld [vmem:[%s5 + $0x68] sm:$0xff]
    %v159 = vld [vmem:[%s5 + $0x70] sm:$0xff]
    %v160 = vld [vmem:[%s5 + $0x78] sm:$0xff]
    %v161 = vld [vmem:[%s6] sm:$0x1]
    %v163 = vperm.slane %v161, 0
    %165 = vmatpush.msra.mxu0 %v160
    %166 = vmatpush.msra.mxu0 %v159
    %167 = vmatpush.msra.mxu0 %v158
    %168 = vmatpush.msra.mxu0 %v157
    %169 = vmatpush.msra.mxu0 %v156
    %170 = vmatpush.msra.mxu0 %v155
    %171 = vmatpush.msra.mxu0 %v154
    %172 = vmatpush.msra.mxu0 %v153
    %173 = vmatpush.msra.mxu0 %v152
    %174 = vmatpush.msra.mxu0 %v151
    %175 = vmatpush.msra.mxu0 %v150
    %176 = vmatpush.msra.mxu0 %v149
    %177 = vmatpush.msra.mxu0 %v148
    %178 = vmatpush.msra.mxu0 %v147
    %179 = vmatpush.msra.mxu0 %v146
    %180 = vmatpush.msra.mxu0 %v145
    %181 = vmatmul.f32.gmra.mxu0 %v143
    %v182 = vpop.f32.mrf.mxu0
    %v183 = vadd.f32 %v163, %v182
    %184 = vmatmul.f32.gmra.mxu0 %v144
    %v185 = vpop.f32.mrf.mxu0
    %v186 = vadd.f32 %v163, %v185
    %187 = vdwg.mxu0
    %vm188 = vcmask 39936
    %189 = vst.msk [vmem:[%s7] sm:$0xff] %vm188, %v183
    %190 = vst.msk [vmem:[%s7 + $0x8] sm:$0xff] %vm188, %v186
    // Predicated region
    $region38: #{tpu_custom_call.1} parent=1 // pred_check
      _
    $region39: #{tpu_custom_call.1} parent=1 // pred_check_branch
      %192 = sbr.rel (0) target = $region41
    $region40: #{tpu_custom_call.1} parent=1 // pred_region
      _
    $region41: #{tpu_custom_call.1} parent=1 // pred_fallthru
      _
    // Predicated region
    $region42: #{tpu_custom_call.1} parent=1 // pred_check
      _
    $region43: #{tpu_custom_call.1} parent=1 // pred_check_branch
      %194 = sbr.rel (0) target = $region45
    $region44: #{tpu_custom_call.1} parent=1 // pred_region
      _
    $region45: #{tpu_custom_call.1} parent=1 // pred_fallthru
      _
    %195 = vsyncpa [#allocation3], 1
    %196 = vsyncpa [#allocation5], 1

</llo_original>
